<compile_context>
chip_gen: v7x
topology: tpu7x:2x2x1
jax: 0.10.0
libtpu: 0.0.40
codegen_flags: <defaults>
</compile_context>

<pallas_src>
import functools

import jax
import jax.numpy as jnp
from jax import lax
from jax.experimental import pallas as pl
from jax.experimental.pallas import tpu as pltpu


def _mean_variance_kernel(w_ref, yp_ref, yt_ref, mean_loss_ref, var_loss_ref,
                          acc_ref, *, lambda1: float, lambda2: float,
                          n_valid: int, tiles_per_split: int):
    i = pl.program_id(1)
    nsteps = pl.num_programs(1)

    @pl.when(i == 0)
    def _init():
        acc_ref[0] = jnp.float32(0.0)
        acc_ref[1] = jnp.float32(0.0)

    # Cast in-kernel: HBM traffic stays at the producer dtype (e.g. bf16 logits).
    yp = yp_ref[...].astype(jnp.float32)            # (TILE_N, K)
    yt = yt_ref[...]                                # (TILE_N, 1) f32, age-centered
    w = w_ref[...]                                  # (K, 128): cols [1, a_c, a_c^2]

    tile_n = yp.shape[0]

    # Numerically stable exp; the row-max offset cancels in the S1/S0, S2/S0
    # ratios, so no explicit softmax normalization is needed.
    row_max = jnp.max(yp, axis=1, keepdims=True)
    e = jnp.exp(yp - row_max)                       # (TILE_N, K)

    # One MXU matmul replaces p = e/sum(e), p*a, p*a*a and 3 XLU reductions.
    # HIGHEST precision keeps the f32 contraction exact (2e-5 loss tolerance).
    s = jnp.dot(e, w, preferred_element_type=jnp.float32,
                precision=jax.lax.Precision.HIGHEST)   # (TILE_N, 128)
    s0 = s[:, 0:1]                                  # sum_k e
    s1 = s[:, 1:2]                                  # sum_k e * a_c
    s2 = s[:, 2:3]                                  # sum_k e * a_c^2

    r = pl.reciprocal(s0, approx=False)             # exact reciprocal
    mean_c = s1 * r                                 # centered softmax mean
    var = s2 * r - mean_c * mean_c                  # shift-invariant variance

    # Mask zero-padded rows (global N may not be a multiple of the tile grid).
    tile_idx = pl.program_id(0) * tiles_per_split + i
    rows = tile_idx * tile_n + lax.broadcasted_iota(jnp.int32, (tile_n, 1), 0)
    valid = (rows < n_valid).astype(jnp.float32)    # (TILE_N, 1)

    diff = mean_c - yt                              # y_true is centered too
    acc_ref[0] += jnp.sum(diff * diff * valid)      # sum of per-row squared error
    acc_ref[1] += jnp.sum(var * valid)              # sum of per-row variances

    @pl.when(i == nsteps - 1)
    def _finalize():
        inv_n = jnp.float32(1.0 / n_valid)
        mean_loss_ref[0, 0] = jnp.float32(0.5 * lambda1) * acc_ref[0] * inv_n
        var_loss_ref[0, 0] = jnp.float32(lambda2) * acc_ref[1] * inv_n


def mean_variance_loss(y_pred, y_true, *, lambda1, lambda2, start_age, end_age,
                       tile_n=2048, num_splits=2):
    """Returns (lambda1 * mean_loss, lambda2 * variance_loss) as f32 scalars."""
    n, k = y_pred.shape
    assert k == end_age - start_age + 1, "logit width must match age range"

    # Row tile: multiple of 8 (sublane), capped by the (rounded-up) batch size.
    n8 = ((n + 7) // 8) * 8
    tile_n = max(8, min(int(tile_n), n8))
    tile_n = ((tile_n + 7) // 8) * 8

    tiles = -(-n // tile_n)
    num_splits = max(1, min(int(num_splits), tiles))    # don't split below 1 tile/core
    tiles_per_split = -(-tiles // num_splits)
    total_tiles = num_splits * tiles_per_split
    padded_n = total_tiles * tile_n

    age_center = 0.5 * (start_age + end_age)

    yp = y_pred                                   # keep producer dtype; cast in-kernel
    yt = (y_true.astype(jnp.float32) - age_center).reshape(n, 1)
    if padded_n != n:
        yp = jnp.pad(yp, ((0, padded_n - n), (0, 0)))
        yt = jnp.pad(yt, ((0, padded_n - n), (0, 0)))

    # Constant MXU weight: columns [1, a_c, a_c^2] with centered ages.
    ages_c = jnp.arange(start_age, end_age + 1, dtype=jnp.float32) - age_center
    w = jnp.zeros((k, 128), jnp.float32)
    w = w.at[:, 0].set(1.0).at[:, 1].set(ages_c).at[:, 2].set(ages_c * ages_c)

    kernel = functools.partial(
        _mean_variance_kernel,
        lambda1=float(lambda1),
        lambda2=float(lambda2),
        n_valid=int(n),
        tiles_per_split=int(tiles_per_split),
    )

    mean_p, var_p = pl.pallas_call(
        kernel,
        grid=(num_splits, tiles_per_split),
        in_specs=[
            pl.BlockSpec((k, 128), lambda c, i: (0, 0)),     # W: resident constant
            pl.BlockSpec((tile_n, k),
                         lambda c, i: (c * tiles_per_split + i, 0)),   # logits tile
            pl.BlockSpec((tile_n, 1),
                         lambda c, i: (c * tiles_per_split + i, 0)),   # target tile
        ],
        out_specs=(
            pl.BlockSpec((1, 1), lambda c, i: (c, 0), memory_space=pltpu.SMEM),
            pl.BlockSpec((1, 1), lambda c, i: (c, 0), memory_space=pltpu.SMEM),
        ),
        out_shape=(
            jax.ShapeDtypeStruct((num_splits, 1), jnp.float32),
            jax.ShapeDtypeStruct((num_splits, 1), jnp.float32),
        ),
        scratch_shapes=[pltpu.SMEM((2,), jnp.float32)],
        compiler_params=pltpu.CompilerParams(
            dimension_semantics=("parallel", "arbitrary"),   # core split x reduction
            vmem_limit_bytes=32 * 1024 * 1024,
        ),
    )(w, yp, yt)

    # Each per-core partial is already scaled by lambda / N, so summing is exact.
    return jnp.sum(mean_p), jnp.sum(var_p)


def _reference(y_pred, y_true, *, lambda1, lambda2, start_age, end_age):
    p = jax.nn.softmax(y_pred.astype(jnp.float32), axis=1)
    a = jnp.arange(start_age, end_age + 1, dtype=jnp.float32)
    mean = jnp.sum(p * a[None, :], axis=1)
    mse = (mean - y_true.astype(jnp.float32)) ** 2
    mean_loss = jnp.mean(mse) / 2.0
    b = (a[None, :] - mean[:, None]) ** 2
    variance_loss = jnp.mean(jnp.sum(p * b, axis=1))
    return lambda1 * mean_loss, lambda2 * variance_loss


if __name__ == "__main__":
    lambda1, lambda2 = 0.2, 0.05
    start_age, end_age = 0, 31          # K = 32 classes
    K = end_age - start_age + 1
    key = jax.random.PRNGKey(0)
    k1, k2, k3, k4, k5, k6 = jax.random.split(key, 6)

    def check(n, tile_n, kk_logits, kk_target, **kw):
        yp = jax.random.normal(kk_logits, (n, K), dtype=jnp.float32)
        yt = jax.random.uniform(kk_target, (n,), minval=float(start_age),
                                maxval=float(end_age), dtype=jnp.float32)
        ml, vl = mean_variance_loss(yp, yt, lambda1=lambda1, lambda2=lambda2,
                                    start_age=start_age, end_age=end_age,
                                    tile_n=tile_n, **kw)
        jax.block_until_ready((ml, vl))
        ml_ref, vl_ref = _reference(yp, yt, lambda1=lambda1, lambda2=lambda2,
                                    start_age=start_age, end_age=end_age)
        assert jnp.allclose(ml, ml_ref, rtol=2e-5, atol=2e-5), (n, ml, ml_ref)
        assert jnp.allclose(vl, vl_ref, rtol=2e-5, atol=2e-5), (n, vl, vl_ref)

    # Test 1: tiny batch (single tile, split collapses to 1).
    check(8, 2048, k1, k2)
    # Test 2: multi-tile grid + 2-way split + row padding/masking (N % tile != 0).
    check(300, 128, k3, k4)
    # Test 3: default big tiles, 2-way split, padding (N = 5000).
    check(5000, 2048, k5, k6)

    print("KERNEL_OK")
</pallas_src>

<mosaic_0001>
module attributes {stable_mosaic.version = 11 : i64} {
  func.func @_mean_variance_kernel(%arg0: i32, %arg1: i32, %arg2: memref<32x128xf32, #tpu.memory_space<vmem>>, %arg3: memref<8x32xf32, #tpu.memory_space<vmem>>, %arg4: memref<8x1xf32, #tpu.memory_space<vmem>>, %arg5: memref<1x1xf32, #tpu.memory_space<smem>>, %arg6: memref<1x1xf32, #tpu.memory_space<smem>>, %arg7: memref<2xf32, #tpu.memory_space<smem>>) attributes {dimension_semantics = [#tpu.dimension_semantics<parallel>, #tpu.dimension_semantics<arbitrary>], iteration_bounds = array<i64: 1, 1>, scalar_prefetch = 0 : i64, scratch_operands = 1 : i64, tpu.core_type = #tpu.core_type<tc>, window_params = [{pipeline_mode = #tpu.pipeline_mode<synchronous>, transform_indices = @transform_0, window_bounds = array<i64: 32, 128>}, {transform_indices = @transform_1, window_bounds = array<i64: 8, 32>}, {transform_indices = @transform_2, window_bounds = array<i64: 8, 1>}, {transform_indices = @transform_3, window_bounds = array<i64: 1, 1>}, {transform_indices = @transform_4, window_bounds = array<i64: 1, 1>}]} {
    %c0_i32 = arith.constant 0 : i32
    %0 = arith.cmpi eq, %arg1, %c0_i32 : i32
    %1 = arith.extui %0 : i1 to i32
    %c0_i32_0 = arith.constant 0 : i32
    %2 = arith.cmpi ne, %1, %c0_i32_0 : i32
    scf.if %2 {
      %cst_15 = arith.constant 0.000000e+00 : f32
      %c0_16 = arith.constant 0 : index
      %51 = memref.load %arg7[%c0_16] : memref<2xf32, #tpu.memory_space<smem>>
      memref.store %cst_15, %arg7[%c0_16] : memref<2xf32, #tpu.memory_space<smem>>
      %cst_17 = arith.constant 0.000000e+00 : f32
      %c1_18 = arith.constant 1 : index
      %52 = memref.load %arg7[%c1_18] : memref<2xf32, #tpu.memory_space<smem>>
      memref.store %cst_17, %arg7[%c1_18] : memref<2xf32, #tpu.memory_space<smem>>
    } else {
    }
    %c0 = arith.constant 0 : index
    %c0_1 = arith.constant 0 : index
    %3 = vector.load %arg3[%c0, %c0_1] : memref<8x32xf32, #tpu.memory_space<vmem>>, vector<8x32xf32>
    %c0_2 = arith.constant 0 : index
    %c0_3 = arith.constant 0 : index
    %4 = vector.load %arg4[%c0_2, %c0_3] : memref<8x1xf32, #tpu.memory_space<vmem>>, vector<8x1xf32>
    %c0_4 = arith.constant 0 : index
    %c0_5 = arith.constant 0 : index
    %5 = vector.load %arg2[%c0_4, %c0_5] : memref<32x128xf32, #tpu.memory_space<vmem>>, vector<32x128xf32>
    %cst = arith.constant dense<0xFF800000> : vector<8xf32>
    %6 = vector.multi_reduction <maximumf>, %3, %cst [1] : vector<8x32xf32> to vector<8xf32>
    %7 = vector.shape_cast %6 : vector<8xf32> to vector<8x1xf32>
    %8 = vector.broadcast %7 : vector<8x1xf32> to vector<8x32xf32>
    %9 = arith.subf %3, %8 : vector<8x32xf32>
    %10 = math.exp %9 : vector<8x32xf32>
    %cst_6 = arith.constant dense<0.000000e+00> : vector<8x128xf32>
    %11 = tpu.matmul %10, %5, %cst_6 {dimension_numbers = #tpu.dot_dimension_numbers<[1], [0], [0], [1], [0, 0, 1, 1], [], []>, precision = #tpu.contract_precision<fp32>} : vector<8x32xf32>, vector<32x128xf32>, vector<8x128xf32> -> vector<8x128xf32>
    %12 = vector.extract_strided_slice %11 {offsets = [0, 0], sizes = [8, 1], strides = [1, 1]} : vector<8x128xf32> to vector<8x1xf32>
    %13 = vector.extract_strided_slice %11 {offsets = [0, 1], sizes = [8, 1], strides = [1, 1]} : vector<8x128xf32> to vector<8x1xf32>
    %14 = vector.extract_strided_slice %11 {offsets = [0, 2], sizes = [8, 1], strides = [1, 1]} : vector<8x128xf32> to vector<8x1xf32>
    %15 = tpu.reciprocal %12 : vector<8x1xf32> -> vector<8x1xf32>
    %16 = arith.mulf %13, %15 : vector<8x1xf32>
    %17 = arith.mulf %14, %15 : vector<8x1xf32>
    %18 = arith.mulf %16, %16 : vector<8x1xf32>
    %19 = arith.subf %17, %18 : vector<8x1xf32>
    %c1_i32 = arith.constant 1 : i32
    %20 = arith.muli %arg0, %c1_i32 : i32
    %21 = arith.addi %20, %arg1 : i32
    %c8_i32 = arith.constant 8 : i32
    %22 = arith.muli %21, %c8_i32 : i32
    %23 = tpu.iota {dimensions = array<i32: 0>} : vector<8x1xi32>
    %24 = vector.broadcast %22 : i32 to vector<8x1xi32>
    %25 = arith.addi %24, %23 : vector<8x1xi32>
    %c8_i32_7 = arith.constant 8 : i32
    %26 = vector.broadcast %c8_i32_7 : i32 to vector<8x1xi32>
    %27 = arith.cmpi slt, %25, %26 : vector<8x1xi32>
    %28 = arith.extui %27 : vector<8x1xi1> to vector<8x1xi32>
    %29 = arith.sitofp %28 : vector<8x1xi32> to vector<8x1xf32>
    %30 = arith.subf %16, %4 : vector<8x1xf32>
    %c0_8 = arith.constant 0 : index
    %31 = memref.load %arg7[%c0_8] : memref<2xf32, #tpu.memory_space<smem>>
    %32 = arith.mulf %30, %30 : vector<8x1xf32>
    %33 = arith.mulf %32, %29 : vector<8x1xf32>
    %34 = vector.shape_cast %33 : vector<8x1xf32> to vector<1x8x1xf32>
    %cst_9 = arith.constant dense<0.000000e+00> : vector<1xf32>
    %35 = vector.multi_reduction <add>, %34, %cst_9 [1, 2] : vector<1x8x1xf32> to vector<1xf32>
    %36 = vector.shape_cast %35 : vector<1xf32> to vector<1x1x1xf32>
    %37 = vector.extract %36[0, 0, 0] : f32 from vector<1x1x1xf32>
    %38 = arith.addf %31, %37 : f32
    %c0_10 = arith.constant 0 : index
    %39 = memref.load %arg7[%c0_10] : memref<2xf32, #tpu.memory_space<smem>>
    memref.store %38, %arg7[%c0_10] : memref<2xf32, #tpu.memory_space<smem>>
    %c1 = arith.constant 1 : index
    %40 = memref.load %arg7[%c1] : memref<2xf32, #tpu.memory_space<smem>>
    %41 = arith.mulf %19, %29 : vector<8x1xf32>
    %42 = vector.shape_cast %41 : vector<8x1xf32> to vector<1x8x1xf32>
    %cst_11 = arith.constant dense<0.000000e+00> : vector<1xf32>
    %43 = vector.multi_reduction <add>, %42, %cst_11 [1, 2] : vector<1x8x1xf32> to vector<1xf32>
    %44 = vector.shape_cast %43 : vector<1xf32> to vector<1x1x1xf32>
    %45 = vector.extract %44[0, 0, 0] : f32 from vector<1x1x1xf32>
    %46 = arith.addf %40, %45 : f32
    %c1_12 = arith.constant 1 : index
    %47 = memref.load %arg7[%c1_12] : memref<2xf32, #tpu.memory_space<smem>>
    memref.store %46, %arg7[%c1_12] : memref<2xf32, #tpu.memory_space<smem>>
    %c0_i32_13 = arith.constant 0 : i32
    %48 = arith.cmpi eq, %arg1, %c0_i32_13 : i32
    %49 = arith.extui %48 : i1 to i32
    %c0_i32_14 = arith.constant 0 : i32
    %50 = arith.cmpi ne, %49, %c0_i32_14 : i32
    scf.if %50 {
      %c0_15 = arith.constant 0 : index
      %51 = memref.load %arg7[%c0_15] : memref<2xf32, #tpu.memory_space<smem>>
      %cst_16 = arith.constant 1.000000e-01 : f32
      %52 = arith.mulf %cst_16, %51 : f32
      %cst_17 = arith.constant 1.250000e-01 : f32
      %53 = arith.mulf %52, %cst_17 : f32
      %c0_18 = arith.constant 0 : index
      %c0_19 = arith.constant 0 : index
      %54 = memref.load %arg5[%c0_18, %c0_19] : memref<1x1xf32, #tpu.memory_space<smem>>
      memref.store %53, %arg5[%c0_18, %c0_19] : memref<1x1xf32, #tpu.memory_space<smem>>
      %c1_20 = arith.constant 1 : index
      %55 = memref.load %arg7[%c1_20] : memref<2xf32, #tpu.memory_space<smem>>
      %cst_21 = arith.constant 5.000000e-02 : f32
      %56 = arith.mulf %cst_21, %55 : f32
      %cst_22 = arith.constant 1.250000e-01 : f32
      %57 = arith.mulf %56, %cst_22 : f32
      %c0_23 = arith.constant 0 : index
      %c0_24 = arith.constant 0 : index
      %58 = memref.load %arg6[%c0_23, %c0_24] : memref<1x1xf32, #tpu.memory_space<smem>>
      memref.store %57, %arg6[%c0_23, %c0_24] : memref<1x1xf32, #tpu.memory_space<smem>>
    } else {
    }
    return
  }
  func.func @transform_0(%arg0: i32, %arg1: i32) -> (i32, i32) {
    %c0_i32 = arith.constant 0 : i32
    %c0_i32_0 = arith.constant 0 : i32
    %c0_i32_1 = arith.constant 0 : i32
    return %c0_i32, %c0_i32_0 : i32, i32
  }
  func.func @transform_1(%arg0: i32, %arg1: i32) -> (i32, i32) {
    %c1_i32 = arith.constant 1 : i32
    %0 = arith.muli %arg0, %c1_i32 : i32
    %1 = arith.addi %0, %arg1 : i32
    %c0_i32 = arith.constant 0 : i32
    %c0_i32_0 = arith.constant 0 : i32
    return %1, %c0_i32 : i32, i32
  }
  func.func @transform_2(%arg0: i32, %arg1: i32) -> (i32, i32) {
    %c1_i32 = arith.constant 1 : i32
    %0 = arith.muli %arg0, %c1_i32 : i32
    %1 = arith.addi %0, %arg1 : i32
    %c0_i32 = arith.constant 0 : i32
    %c0_i32_0 = arith.constant 0 : i32
    return %1, %c0_i32 : i32, i32
  }
  func.func @transform_3(%arg0: i32, %arg1: i32) -> (i32, i32) {
    %c0_i32 = arith.constant 0 : i32
    %c0_i32_0 = arith.constant 0 : i32
    return %arg0, %c0_i32 : i32, i32
  }
  func.func @transform_4(%arg0: i32, %arg1: i32) -> (i32, i32) {
    %c0_i32 = arith.constant 0 : i32
    %c0_i32_0 = arith.constant 0 : i32
    return %arg0, %c0_i32 : i32, i32
  }
}

</mosaic_0001>

<llo_original>
// kernel: tpu_custom_call.1
$region0: #{tpu_custom_call.1}
  #allocation0 [shape = 'u32[]', space=smem, size = 0x4, offset = 0x4, fixed_abs, tag = 'smem constant byte address 0x4 - core index']
  #allocation1 [shape = 'u32[144,128]{1,0:T(1,128)}', space=vmem, size = 0x12000, scoped, tag = 'internal scratch']
  #allocation2 [shape = 'f32[2]{0:T(128)}', space=smem, size = 0x200, scoped, tag = 'scratch operand']
  %s0 = inlined_call_operand.hbm [shape: f32[32,128], index: 0, kind: input, shape index: {}]
  %s1 = inlined_call_operand.vmem [shape: f32[8,32], index: 1, kind: input, shape index: {}]
  %s2 = inlined_call_operand.vmem [shape: f32[8,1], index: 2, kind: input, shape index: {}]
  %s3 = inlined_call_operand.hbm [shape: f32[1,1], index: 3, kind: output, shape index: {0}]
  %s4 = inlined_call_operand.hbm [shape: f32[1,1], index: 4, kind: output, shape index: {1}]
  %5 = xla_tuple %s3, %s4
  %s6 = sld [smem:[#allocation0]]
  $region42: #{tpu_custom_call.1} parent=0
    _
  %s8 = ssub.s32 1, %s6
  %s9 = scalar_select 0, %s8, %s6
  $region1: #{tpu_custom_call.1} parent=0
    #allocation3 [shape = 'u8[16384]{0}', space=vmem, size = 0x4000, scoped, tag = 'input window, operand 0, single buffered']
    #allocation4 [shape = 's32[1]{0}', space=sflag, size = 0x4, scoped, tag = 'scoped memory for tpu_custom_call.1']
    #allocation5 [shape = 's32[1]{0}', space=sflag, size = 0x4, scoped, tag = 'scoped memory for tpu_custom_call.1']
    #allocation6 [shape = 'u8[512]{0}', space=smem, size = 0x200, scoped, tag = 'output window, operand 0, single buffered']
    #allocation7 [shape = 'u8[512]{0}', space=smem, size = 0x200, scoped, tag = 'output window, operand 1, single buffered']
    #allocation8 [shape = 's32[1]{0}', space=sflag, size = 0x4, scoped, tag = 'scoped memory for tpu_custom_call.1']
    %10 = vsyncpa [#allocation4], 0
    %11 = vsyncpa [#allocation5], 0
    %12 = vsyncpa [#allocation8], 0
    // Predicated region
    $region2: #{tpu_custom_call.1} parent=1 // pred_check
      _
    $region3: #{tpu_custom_call.1} parent=1 // pred_check_branch
      %14 = sbr.rel (0) target = $region5
    $region4: #{tpu_custom_call.1} parent=1 // pred_region
      %s16 = ssub.s32 512, 512
      %17 = vsyncadd [#allocation4], %s16
      %s18 = sshll.u32 [#allocation3], 4
      %s19 = int_to_ptr.vmem [resolvable:$true] %s18
      %24 = dma.hbm_to_vmem [thread:$0]  %s0, 512, %s19, [#allocation4], 128, 128, 8
    $region5: #{tpu_custom_call.1} parent=1 // pred_fallthru
      _
    // Predicated region
    $region6: #{tpu_custom_call.1} parent=1 // pred_check
      _
    $region7: #{tpu_custom_call.1} parent=1 // pred_check_branch
      %26 = sbr.rel (0) target = $region9
    $region8: #{tpu_custom_call.1} parent=1 // pred_region
      %s27 = sadd.s32 0, 0
      %p28 = scmp.lt.s32.totalorder %s27, 0
      %s29 = scalar_select %p28, %s27, 0
      %s30 = smul.addr %s29, 8
      %s31 = scalar_lea.vmem %s1, %s30
      %s32 = sadd.s32 0, 0
    $region9: #{tpu_custom_call.1} parent=1 // pred_fallthru
      _
    // Predicated region
    $region10: #{tpu_custom_call.1} parent=1 // pred_check
      _
    $region11: #{tpu_custom_call.1} parent=1 // pred_check_branch
      %34 = sbr.rel (0) target = $region13
    $region12: #{tpu_custom_call.1} parent=1 // pred_region
      %s35 = sadd.s32 0, 0
      %p36 = scmp.lt.s32.totalorder %s35, 0
      %s37 = scalar_select %p36, %s35, 0
      %s38 = smul.addr %s37, 8
      %s39 = scalar_lea.vmem %s2, %s38
      %s40 = sadd.s32 0, 0
    $region13: #{tpu_custom_call.1} parent=1 // pred_fallthru
      _
    // Predicated region
    $region14: #{tpu_custom_call.1} parent=1 // pred_check
      _
    $region15: #{tpu_custom_call.1} parent=1 // pred_check_branch
      %42 = sbr.rel (0) target = $region17
    $region16: #{tpu_custom_call.1} parent=1 // pred_region
      %43 = dma.done [#allocation4], 512
    $region17: #{tpu_custom_call.1} parent=1 // pred_fallthru
      _
    %s44 = sadd.s32 0, 0
    %p45 = scmp.lt.s32.totalorder %s44, 0
    %s46 = scalar_select %p45, %s44, 0
    %s47 = smul.addr %s46, 8
    %s48 = scalar_lea.vmem %s1, %s47
    %s49 = sadd.s32 0, 0
    %p50 = scmp.lt.s32.totalorder %s49, 0
    %s51 = scalar_select %p50, %s49, 0
    %s52 = smul.addr %s51, 8
    %s53 = scalar_lea.vmem %s2, %s52
    %s54 = sadd.s32 0, 0
    %p55 = scmp.lt.s32.totalorder %s54, 0
    %s56 = scalar_select %p55, %s54, 0
    %s57 = smul.addr %s56, 8
    %s58 = scalar_lea.vmem %s1, %s57
    %s59 = sadd.s32 0, 0
    %s60 = sadd.s32 0, 0
    %p61 = scmp.lt.s32.totalorder %s60, 0
    %s62 = scalar_select %p61, %s60, 0
    %s63 = smul.addr %s62, 8
    %s64 = scalar_lea.vmem %s2, %s63
    %s65 = sadd.s32 0, 0
    %p66 = scmp.eq.s32.totalorder 0, 0
    // Predicated region
    $region18: #{tpu_custom_call.1} parent=1 // pred_check
      %p67 = pneg %p66
    $region19: #{tpu_custom_call.1} parent=1 // pred_check_branch
      %69 = sbr.rel (%p67) target = $region21
    $region20: #{tpu_custom_call.1} parent=1 // pred_region
      %s70 = scalar_lea.smem [#allocation2], 0
      %71 = sst [smem:[%s70]] 0.0
      %s72 = scalar_lea.smem [#allocation2], 1
      %73 = sst [smem:[%s72]] 0.0
    $region21: #{tpu_custom_call.1} parent=1 // pred_fallthru
      _
    %v74 = vld [vmem:[%s58] sm:$0xff]
    %v75 = vld [vmem:[%s64] sm:$0xff]
    %v76 = vld [vmem:[#allocation3] sm:$0xff]
    %v77 = vld [vmem:[#allocation3 + $0x8] sm:$0xff]
    %v78 = vld [vmem:[#allocation3 + $0x10] sm:$0xff]
    %v79 = vld [vmem:[#allocation3 + $0x18] sm:$0xff]
    %vm80 = vcmask 261120
    %v81 = vsel %vm80, %v74, -inf
    %82 = vmax.xlane.f32.xlu0 %v81
    %v83 = vpop.xlane.xlu0 %82
    %v84 = vsub.f32 %v74, %v83
    %v85 = vmul.f32 %v84, 1.442695
    %v86 = vpow.pop %v85
    %v88 = vsel %vm80, %v86, 0
    %90 = vmatprep.subr.mxu0 0.0
    %v91 = vand.u32 %v76, 4294901760
    %92 = vmatpush1.msra.mxu0 %v91
    %93 = vmatprep.subr.mxu0 0.0
    %v94 = vand.u32 %v77, 4294901760
    %95 = vmatpush1.msra.mxu0 %v94
    %96 = vmatprep.subr.mxu0 0.0
    %v97 = vand.u32 %v78, 4294901760
    %98 = vmatpush1.msra.mxu0 %v97
    %99 = vmatprep.subr.mxu0 0.0
    %v100 = vand.u32 %v79, 4294901760
    %101 = vmatpush1.msra.mxu0 %v100
    %102 = vmatprep.subr.mxu0 0.0
    %103 = vmatpush1.msra.mxu0 0.0
    %104 = vmatprep.subr.mxu0 0.0
    %105 = vmatpush1.msra.mxu0 0.0
    %106 = vmatprep.subr.mxu0 0.0
    %107 = vmatpush1.msra.mxu0 0.0
    %108 = vmatprep.subr.mxu0 0.0
    %109 = vmatpush1.msra.mxu0 0.0
    %110 = vmatprep.subr.mxu0 0.0
    %111 = vmatpush1.msra.mxu0 0.0
    %112 = vmatprep.subr.mxu0 0.0
    %113 = vmatpush1.msra.mxu0 0.0
    %114 = vmatprep.subr.mxu0 0.0
    %115 = vmatpush1.msra.mxu0 0.0
    %116 = vmatprep.subr.mxu0 0.0
    %117 = vmatpush1.msra.mxu0 0.0
    %118 = vmatprep.subr.mxu0 0.0
    %119 = vmatpush1.msra.mxu0 0.0
    %120 = vmatprep.subr.mxu0 0.0
    %121 = vmatpush1.msra.mxu0 0.0
    %122 = vmatprep.subr.mxu0 0.0
    %123 = vmatpush1.msra.mxu0 0.0
    %124 = vmatprep.subr.mxu0 0.0
    %125 = vmatpush1.msra.mxu0 0.0
    %126 = vmatprep.subr.mxu0 0.0
    %127 = vmatpush1.msra.mxu0 0.0
    %128 = vmatprep.subr.mxu0 0.0
    %129 = vmatpush1.msra.mxu0 0.0
    %130 = vmatprep.subr.mxu0 0.0
    %131 = vmatpush1.msra.mxu0 0.0
    %132 = vmatprep.subr.mxu0 0.0
    %133 = vmatpush1.msra.mxu0 0.0
    %134 = vmatprep.subr.mxu0 0.0
    %135 = vmatpush1.msra.mxu0 0.0
    %136 = vmatprep.subr.mxu0 0.0
    %137 = vmatpush1.msra.mxu0 0.0
    %138 = vmatprep.subr.mxu0 0.0
    %139 = vmatpush1.msra.mxu0 0.0
    %140 = vmatprep.subr.mxu0 0.0
    %141 = vmatpush1.msra.mxu0 0.0
    %142 = vmatprep.subr.mxu0 0.0
    %143 = vmatpush1.msra.mxu0 0.0
    %144 = vmatprep.subr.mxu0 0.0
    %145 = vmatpush1.msra.mxu0 0.0
    %146 = vmatprep.subr.mxu0 0.0
    %147 = vmatpush1.msra.mxu0 0.0
    %148 = vmatprep.subr.mxu0 0.0
    %149 = vmatpush1.msra.mxu0 0.0
    %150 = vmatprep.subr.mxu0 0.0
    %151 = vmatpush1.msra.mxu0 0.0
    %152 = vmatprep.subr.mxu0 0.0
    %153 = vmatpush1.msra.mxu0 0.0
    %154 = vmatprep.subr.mxu0 0.0
    %155 = vmatpush1.msra.mxu0 0.0
    %156 = vmatprep.subr.mxu0 0.0
    %157 = vmatpush1.msra.mxu0 0.0
    %158 = vmatprep.mubr.f32.mxu0 0.0
    %v159 = vand.u32 %v88, 4294901760
    %v160 = vsub.f32 %v88, %v159
    %v161 = vand.u32 %v160, 4294901760
    %v162 = vsub.f32 %v160, %v161
    %v163 = vand.u32 %v162, 4294901760
    %164 = vmatmul.mubr.f32.gmra.mrb[0].mxu0 %v163
    %v165 = vpop.f32.mrb[0].mxu0
    %v166 = vadd.f32 0.0, %v165
    %v167 = vpop.f32.mrb[0].mxu0
    %168 = vdwg.mxu0
    %169 = vmatprep.subr.mxu0 0.0
    %v170 = vand.u32 %v76, 4294901760
    %v171 = vsub.f32 %v76, %v170
    %v172 = vand.u32 %v171, 4294901760
    %v173 = vsub.f32 %v171, %v172
    %v174 = vand.u32 %v173, 4294901760
    %175 = vmatpush1.msra.mxu0 %v174
    %176 = vmatprep.subr.mxu0 0.0
    %v177 = vand.u32 %v77, 4294901760
    %v178 = vsub.f32 %v77, %v177
    %v179 = vand.u32 %v178, 4294901760
    %v180 = vsub.f32 %v178, %v179
    %v181 = vand.u32 %v180, 4294901760
    %182 = vmatpush1.msra.mxu0 %v181
    %183 = vmatprep.subr.mxu0 0.0
    %v184 = vand.u32 %v78, 4294901760
    %v185 = vsub.f32 %v78, %v184
    %v186 = vand.u32 %v185, 4294901760
    %v187 = vsub.f32 %v185, %v186
    %v188 = vand.u32 %v187, 4294901760
    %189 = vmatpush1.msra.mxu0 %v188
    %190 = vmatprep.subr.mxu0 0.0
    %v191 = vand.u32 %v79, 4294901760
    %v192 = vsub.f32 %v79, %v191
    %v193 = vand.u32 %v192, 4294901760
    %v194 = vsub.f32 %v192, %v193
    %v195 = vand.u32 %v194, 4294901760
    %196 = vmatpush1.msra.mxu0 %v195
    %197 = vmatprep.subr.mxu0 0.0
    %198 = vmatpush1.msra.mxu0 0.0
    %199 = vmatprep.subr.mxu0 0.0
    %200 = vmatpush1.msra.mxu0 0.0
    %201 = vmatprep.subr.mxu0 0.0
    %202 = vmatpush1.msra.mxu0 0.0
    %203 = vmatprep.subr.mxu0 0.0
    %204 = vmatpush1.msra.mxu0 0.0
    %205 = vmatprep.subr.mxu0 0.0
    %206 = vmatpush1.msra.mxu0 0.0
    %207 = vmatprep.subr.mxu0 0.0
    %208 = vmatpush1.msra.mxu0 0.0
    %209 = vmatprep.subr.mxu0 0.0
    %210 = vmatpush1.msra.mxu0 0.0
    %211 = vmatprep.subr.mxu0 0.0
    %212 = vmatpush1.msra.mxu0 0.0
    %213 = vmatprep.subr.mxu0 0.0
    %214 = vmatpush1.msra.mxu0 0.0
    %215 = vmatprep.subr.mxu0 0.0
    %216 = vmatpush1.msra.mxu0 0.0
    %217 = vmatprep.subr.mxu0 0.0
    %218 = vmatpush1.msra.mxu0 0.0
    %219 = vmatprep.subr.mxu0 0.0
    %220 = vmatpush1.msra.mxu0 0.0
    %221 = vmatprep.subr.mxu0 0.0
    %222 = vmatpush1.msra.mxu0 0.0
    %223 = vmatprep.subr.mxu0 0.0
    %224 = vmatpush1.msra.mxu0 0.0
    %225 = vmatprep.subr.mxu0 0.0
    %226 = vmatpush1.msra.mxu0 0.0
    %227 = vmatprep.subr.mxu0 0.0
    %228 = vmatpush1.msra.mxu0 0.0
    %229 = vmatprep.subr.mxu0 0.0
    %230 = vmatpush1.msra.mxu0 0.0
    %231 = vmatprep.subr.mxu0 0.0
    %232 = vmatpush1.msra.mxu0 0.0
    %233 = vmatprep.subr.mxu0 0.0
    %234 = vmatpush1.msra.mxu0 0.0
    %235 = vmatprep.subr.mxu0 0.0
    %236 = vmatpush1.msra.mxu0 0.0
    %237 = vmatprep.subr.mxu0 0.0
    %238 = vmatpush1.msra.mxu0 0.0
    %239 = vmatprep.subr.mxu0 0.0
    %240 = vmatpush1.msra.mxu0 0.0
    %241 = vmatprep.subr.mxu0 0.0
    %242 = vmatpush1.msra.mxu0 0.0
    %243 = vmatprep.subr.mxu0 0.0
    %244 = vmatpush1.msra.mxu0 0.0
    %245 = vmatprep.subr.mxu0 0.0
    %246 = vmatpush1.msra.mxu0 0.0
    %247 = vmatprep.subr.mxu0 0.0
    %248 = vmatpush1.msra.mxu0 0.0
    %249 = vmatprep.subr.mxu0 0.0
    %250 = vmatpush1.msra.mxu0 0.0
    %251 = vmatprep.subr.mxu0 0.0
    %252 = vmatpush1.msra.mxu0 0.0
    %253 = vmatprep.mubr.f32.mxu0 0.0
    %v254 = vand.u32 %v88, 4294901760
    %255 = vmatmul.mubr.f32.gmra.mrb[0].mxu0 %v254
    %v256 = vpop.f32.mrb[0].mxu0
    %v257 = vadd.f32 %v166, %v256
    %v258 = vpop.f32.mrb[0].mxu0
    %259 = vdwg.mxu0
    %260 = vmatprep.subr.mxu0 0.0
    %v261 = vand.u32 %v76, 4294901760
    %v262 = vsub.f32 %v76, %v261
    %263 = vmatpush1.msra.mxu0 %v262
    %264 = vmatprep.subr.mxu0 0.0
    %v265 = vand.u32 %v77, 4294901760
    %v266 = vsub.f32 %v77, %v265
    %267 = vmatpush1.msra.mxu0 %v266
    %268 = vmatprep.subr.mxu0 0.0
    %v269 = vand.u32 %v78, 4294901760
    %v270 = vsub.f32 %v78, %v269
    %271 = vmatpush1.msra.mxu0 %v270
    %272 = vmatprep.subr.mxu0 0.0
    %v273 = vand.u32 %v79, 4294901760
    %v274 = vsub.f32 %v79, %v273
    %275 = vmatpush1.msra.mxu0 %v274
    %276 = vmatprep.subr.mxu0 0.0
    %277 = vmatpush1.msra.mxu0 0.0
    %278 = vmatprep.subr.mxu0 0.0
    %279 = vmatpush1.msra.mxu0 0.0
    %280 = vmatprep.subr.mxu0 0.0
    %281 = vmatpush1.msra.mxu0 0.0
    %282 = vmatprep.subr.mxu0 0.0
    %283 = vmatpush1.msra.mxu0 0.0
    %284 = vmatprep.subr.mxu0 0.0
    %285 = vmatpush1.msra.mxu0 0.0
    %286 = vmatprep.subr.mxu0 0.0
    %287 = vmatpush1.msra.mxu0 0.0
    %288 = vmatprep.subr.mxu0 0.0
    %289 = vmatpush1.msra.mxu0 0.0
    %290 = vmatprep.subr.mxu0 0.0
    %291 = vmatpush1.msra.mxu0 0.0
    %292 = vmatprep.subr.mxu0 0.0
    %293 = vmatpush1.msra.mxu0 0.0
    %294 = vmatprep.subr.mxu0 0.0
    %295 = vmatpush1.msra.mxu0 0.0
    %296 = vmatprep.subr.mxu0 0.0
    %297 = vmatpush1.msra.mxu0 0.0
    %298 = vmatprep.subr.mxu0 0.0
    %299 = vmatpush1.msra.mxu0 0.0
    %300 = vmatprep.subr.mxu0 0.0
    %301 = vmatpush1.msra.mxu0 0.0
    %302 = vmatprep.subr.mxu0 0.0
    %303 = vmatpush1.msra.mxu0 0.0
    %304 = vmatprep.subr.mxu0 0.0
    %305 = vmatpush1.msra.mxu0 0.0
    %306 = vmatprep.subr.mxu0 0.0
    %307 = vmatpush1.msra.mxu0 0.0
    %308 = vmatprep.subr.mxu0 0.0
    %309 = vmatpush1.msra.mxu0 0.0
    %310 = vmatprep.subr.mxu0 0.0
    %311 = vmatpush1.msra.mxu0 0.0
    %312 = vmatprep.subr.mxu0 0.0
    %313 = vmatpush1.msra.mxu0 0.0
    %314 = vmatprep.subr.mxu0 0.0
    %315 = vmatpush1.msra.mxu0 0.0
    %316 = vmatprep.subr.mxu0 0.0
    %317 = vmatpush1.msra.mxu0 0.0
    %318 = vmatprep.subr.mxu0 0.0
    %319 = vmatpush1.msra.mxu0 0.0
    %320 = vmatprep.subr.mxu0 0.0
    %321 = vmatpush1.msra.mxu0 0.0
    %322 = vmatprep.subr.mxu0 0.0
    %323 = vmatpush1.msra.mxu0 0.0
    %324 = vmatprep.subr.mxu0 0.0
    %325 = vmatpush1.msra.mxu0 0.0
    %326 = vmatprep.subr.mxu0 0.0
    %327 = vmatpush1.msra.mxu0 0.0
    %328 = vmatprep.subr.mxu0 0.0
    %329 = vmatpush1.msra.mxu0 0.0
    %330 = vmatprep.subr.mxu0 0.0
    %331 = vmatpush1.msra.mxu0 0.0
    %332 = vmatprep.mubr.f32.mxu0 0.0
    %v333 = vand.u32 %v88, 4294901760
    %v334 = vsub.f32 %v88, %v333
    %335 = vmatmul.mubr.f32.gmra.mrb[0].mxu0 %v334
    %v336 = vpop.f32.mrb[0].mxu0
    %v337 = vadd.f32 %v257, %v336
    %v338 = vpop.f32.mrb[0].mxu0
    %339 = vdwg.mxu0
    %340 = vmatprep.subr.mxu0 0.0
    %v341 = vand.u32 %v76, 4294901760
    %342 = vmatpush1.msra.mxu0 %v341
    %343 = vmatprep.subr.mxu0 0.0
    %v344 = vand.u32 %v77, 4294901760
    %345 = vmatpush1.msra.mxu0 %v344
    %346 = vmatprep.subr.mxu0 0.0
    %v347 = vand.u32 %v78, 4294901760
    %348 = vmatpush1.msra.mxu0 %v347
    %349 = vmatprep.subr.mxu0 0.0
    %v350 = vand.u32 %v79, 4294901760
    %351 = vmatpush1.msra.mxu0 %v350
    %352 = vmatprep.subr.mxu0 0.0
    %353 = vmatpush1.msra.mxu0 0.0
    %354 = vmatprep.subr.mxu0 0.0
    %355 = vmatpush1.msra.mxu0 0.0
    %356 = vmatprep.subr.mxu0 0.0
    %357 = vmatpush1.msra.mxu0 0.0
    %358 = vmatprep.subr.mxu0 0.0
    %359 = vmatpush1.msra.mxu0 0.0
    %360 = vmatprep.subr.mxu0 0.0
    %361 = vmatpush1.msra.mxu0 0.0
    %362 = vmatprep.subr.mxu0 0.0
    %363 = vmatpush1.msra.mxu0 0.0
    %364 = vmatprep.subr.mxu0 0.0
    %365 = vmatpush1.msra.mxu0 0.0
    %366 = vmatprep.subr.mxu0 0.0
    %367 = vmatpush1.msra.mxu0 0.0
    %368 = vmatprep.subr.mxu0 0.0
    %369 = vmatpush1.msra.mxu0 0.0
    %370 = vmatprep.subr.mxu0 0.0
    %371 = vmatpush1.msra.mxu0 0.0
    %372 = vmatprep.subr.mxu0 0.0
    %373 = vmatpush1.msra.mxu0 0.0
    %374 = vmatprep.subr.mxu0 0.0
    %375 = vmatpush1.msra.mxu0 0.0
    %376 = vmatprep.subr.mxu0 0.0
    %377 = vmatpush1.msra.mxu0 0.0
    %378 = vmatprep.subr.mxu0 0.0
    %379 = vmatpush1.msra.mxu0 0.0
    %380 = vmatprep.subr.mxu0 0.0
    %381 = vmatpush1.msra.mxu0 0.0
    %382 = vmatprep.subr.mxu0 0.0
    %383 = vmatpush1.msra.mxu0 0.0
    %384 = vmatprep.subr.mxu0 0.0
    %385 = vmatpush1.msra.mxu0 0.0
    %386 = vmatprep.subr.mxu0 0.0
    %387 = vmatpush1.msra.mxu0 0.0
    %388 = vmatprep.subr.mxu0 0.0
    %389 = vmatpush1.msra.mxu0 0.0
    %390 = vmatprep.subr.mxu0 0.0
    %391 = vmatpush1.msra.mxu0 0.0
    %392 = vmatprep.subr.mxu0 0.0
    %393 = vmatpush1.msra.mxu0 0.0
    %394 = vmatprep.subr.mxu0 0.0
    %395 = vmatpush1.msra.mxu0 0.0
    %396 = vmatprep.subr.mxu0 0.0
    %397 = vmatpush1.msra.mxu0 0.0
    %398 = vmatprep.subr.mxu0 0.0
    %399 = vmatpush1.msra.mxu0 0.0
    %400 = vmatprep.subr.mxu0 0.0
    %401 = vmatpush1.msra.mxu0 0.0
    %402 = vmatprep.subr.mxu0 0.0
    %403 = vmatpush1.msra.mxu0 0.0
    %404 = vmatprep.subr.mxu0 0.0
    %405 = vmatpush1.msra.mxu0 0.0
    %406 = vmatprep.subr.mxu0 0.0
    %407 = vmatpush1.msra.mxu0 0.0
    %408 = vmatprep.mubr.f32.mxu0 0.0
    %v409 = vand.u32 %v88, 4294901760
    %v410 = vsub.f32 %v88, %v409
    %v411 = vand.u32 %v410, 4294901760
    %412 = vmatmul.mubr.f32.gmra.mrb[0].mxu0 %v411
    %v413 = vpop.f32.mrb[0].mxu0
    %v414 = vadd.f32 %v337, %v413
    %v415 = vpop.f32.mrb[0].mxu0
    %416 = vdwg.mxu0
    %417 = vmatprep.subr.mxu0 0.0
    %v418 = vand.u32 %v76, 4294901760
    %v419 = vsub.f32 %v76, %v418
    %v420 = vand.u32 %v419, 4294901760
    %421 = vmatpush1.msra.mxu0 %v420
    %422 = vmatprep.subr.mxu0 0.0
    %v423 = vand.u32 %v77, 4294901760
    %v424 = vsub.f32 %v77, %v423
    %v425 = vand.u32 %v424, 4294901760
    %426 = vmatpush1.msra.mxu0 %v425
    %427 = vmatprep.subr.mxu0 0.0
    %v428 = vand.u32 %v78, 4294901760
    %v429 = vsub.f32 %v78, %v428
    %v430 = vand.u32 %v429, 4294901760
    %431 = vmatpush1.msra.mxu0 %v430
    %432 = vmatprep.subr.mxu0 0.0
    %v433 = vand.u32 %v79, 4294901760
    %v434 = vsub.f32 %v79, %v433
    %v435 = vand.u32 %v434, 4294901760
    %436 = vmatpush1.msra.mxu0 %v435
    %437 = vmatprep.subr.mxu0 0.0
    %438 = vmatpush1.msra.mxu0 0.0
    %439 = vmatprep.subr.mxu0 0.0
    %440 = vmatpush1.msra.mxu0 0.0
    %441 = vmatprep.subr.mxu0 0.0
    %442 = vmatpush1.msra.mxu0 0.0
    %443 = vmatprep.subr.mxu0 0.0
    %444 = vmatpush1.msra.mxu0 0.0
    %445 = vmatprep.subr.mxu0 0.0
    %446 = vmatpush1.msra.mxu0 0.0
    %447 = vmatprep.subr.mxu0 0.0
    %448 = vmatpush1.msra.mxu0 0.0
    %449 = vmatprep.subr.mxu0 0.0
    %450 = vmatpush1.msra.mxu0 0.0
    %451 = vmatprep.subr.mxu0 0.0
    %452 = vmatpush1.msra.mxu0 0.0
    %453 = vmatprep.subr.mxu0 0.0
    %454 = vmatpush1.msra.mxu0 0.0
    %455 = vmatprep.subr.mxu0 0.0
    %456 = vmatpush1.msra.mxu0 0.0
    %457 = vmatprep.subr.mxu0 0.0
    %458 = vmatpush1.msra.mxu0 0.0
    %459 = vmatprep.subr.mxu0 0.0
    %460 = vmatpush1.msra.mxu0 0.0
    %461 = vmatprep.subr.mxu0 0.0
    %462 = vmatpush1.msra.mxu0 0.0
    %463 = vmatprep.subr.mxu0 0.0
    %464 = vmatpush1.msra.mxu0 0.0
    %465 = vmatprep.subr.mxu0 0.0
    %466 = vmatpush1.msra.mxu0 0.0
    %467 = vmatprep.subr.mxu0 0.0
    %468 = vmatpush1.msra.mxu0 0.0
    %469 = vmatprep.subr.mxu0 0.0
    %470 = vmatpush1.msra.mxu0 0.0
    %471 = vmatprep.subr.mxu0 0.0
    %472 = vmatpush1.msra.mxu0 0.0
    %473 = vmatprep.subr.mxu0 0.0
    %474 = vmatpush1.msra.mxu0 0.0
    %475 = vmatprep.subr.mxu0 0.0
    %476 = vmatpush1.msra.mxu0 0.0
    %477 = vmatprep.subr.mxu0 0.0
    %478 = vmatpush1.msra.mxu0 0.0
    %479 = vmatprep.subr.mxu0 0.0
    %480 = vmatpush1.msra.mxu0 0.0
    %481 = vmatprep.subr.mxu0 0.0
    %482 = vmatpush1.msra.mxu0 0.0
    %483 = vmatprep.subr.mxu0 0.0
    %484 = vmatpush1.msra.mxu0 0.0
    %485 = vmatprep.subr.mxu0 0.0
    %486 = vmatpush1.msra.mxu0 0.0
    %487 = vmatprep.subr.mxu0 0.0
    %488 = vmatpush1.msra.mxu0 0.0
    %489 = vmatprep.subr.mxu0 0.0
    %490 = vmatpush1.msra.mxu0 0.0
    %491 = vmatprep.subr.mxu0 0.0
    %492 = vmatpush1.msra.mxu0 0.0
    %493 = vmatprep.mubr.f32.mxu0 0.0
    %v494 = vand.u32 %v88, 4294901760
    %495 = vmatmul.mubr.f32.gmra.mrb[0].mxu0 %v494
    %v496 = vpop.f32.mrb[0].mxu0
    %v497 = vadd.f32 %v414, %v496
    %v498 = vpop.f32.mrb[0].mxu0
    %499 = vdwg.mxu0
    %500 = vmatprep.subr.mxu0 0.0
    %v501 = vand.u32 %v76, 4294901760
    %502 = vmatpush1.msra.mxu0 %v501
    %503 = vmatprep.subr.mxu0 0.0
    %v504 = vand.u32 %v77, 4294901760
    %505 = vmatpush1.msra.mxu0 %v504
    %506 = vmatprep.subr.mxu0 0.0
    %v507 = vand.u32 %v78, 4294901760
    %508 = vmatpush1.msra.mxu0 %v507
    %509 = vmatprep.subr.mxu0 0.0
    %v510 = vand.u32 %v79, 4294901760
    %511 = vmatpush1.msra.mxu0 %v510
    %512 = vmatprep.subr.mxu0 0.0
    %513 = vmatpush1.msra.mxu0 0.0
    %514 = vmatprep.subr.mxu0 0.0
    %515 = vmatpush1.msra.mxu0 0.0
    %516 = vmatprep.subr.mxu0 0.0
    %517 = vmatpush1.msra.mxu0 0.0
    %518 = vmatprep.subr.mxu0 0.0
    %519 = vmatpush1.msra.mxu0 0.0
    %520 = vmatprep.subr.mxu0 0.0
    %521 = vmatpush1.msra.mxu0 0.0
    %522 = vmatprep.subr.mxu0 0.0
    %523 = vmatpush1.msra.mxu0 0.0
    %524 = vmatprep.subr.mxu0 0.0
    %525 = vmatpush1.msra.mxu0 0.0
    %526 = vmatprep.subr.mxu0 0.0
    %527 = vmatpush1.msra.mxu0 0.0
    %528 = vmatprep.subr.mxu0 0.0
    %529 = vmatpush1.msra.mxu0 0.0
    %530 = vmatprep.subr.mxu0 0.0
    %531 = vmatpush1.msra.mxu0 0.0
    %532 = vmatprep.subr.mxu0 0.0
    %533 = vmatpush1.msra.mxu0 0.0
    %534 = vmatprep.subr.mxu0 0.0
    %535 = vmatpush1.msra.mxu0 0.0
    %536 = vmatprep.subr.mxu0 0.0
    %537 = vmatpush1.msra.mxu0 0.0
    %538 = vmatprep.subr.mxu0 0.0
    %539 = vmatpush1.msra.mxu0 0.0
    %540 = vmatprep.subr.mxu0 0.0
    %541 = vmatpush1.msra.mxu0 0.0
    %542 = vmatprep.subr.mxu0 0.0
    %543 = vmatpush1.msra.mxu0 0.0
    %544 = vmatprep.subr.mxu0 0.0
    %545 = vmatpush1.msra.mxu0 0.0
    %546 = vmatprep.subr.mxu0 0.0
    %547 = vmatpush1.msra.mxu0 0.0
    %548 = vmatprep.subr.mxu0 0.0
    %549 = vmatpush1.msra.mxu0 0.0
    %550 = vmatprep.subr.mxu0 0.0
    %551 = vmatpush1.msra.mxu0 0.0
    %552 = vmatprep.subr.mxu0 0.0
    %553 = vmatpush1.msra.mxu0 0.0
    %554 = vmatprep.subr.mxu0 0.0
    %555 = vmatpush1.msra.mxu0 0.0
    %556 = vmatprep.subr.mxu0 0.0
    %557 = vmatpush1.msra.mxu0 0.0
    %558 = vmatprep.subr.mxu0 0.0
    %559 = vmatpush1.msra.mxu0 0.0
    %560 = vmatprep.subr.mxu0 0.0
    %561 = vmatpush1.msra.mxu0 0.0
    %562 = vmatprep.subr.mxu0 0.0
    %563 = vmatpush1.msra.mxu0 0.0
    %564 = vmatprep.subr.mxu0 0.0
    %565 = vmatpush1.msra.mxu0 0.0
    %566 = vmatprep.subr.mxu0 0.0
    %567 = vmatpush1.msra.mxu0 0.0
    %568 = vmatprep.mubr.f32.mxu0 0.0
    %v569 = vand.u32 %v88, 4294901760
    %570 = vmatmul.mubr.f32.gmra.mrb[0].mxu0 %v569
    %v571 = vpop.f32.mrb[0].mxu0
    %v572 = vadd.f32 %v497, %v571
    %v573 = vpop.f32.mrb[0].mxu0
    %574 = vdwg.mxu0
    %v575 = vrcp.pop %v572
    %577 = vrot.lane.b32.xlu0 %v575, 1
    %v578 = vpop.permute.xlu0 %577
    %v580 = vmul.f32 %v572, %v578
    %581 = vrot.lane.b32.xlu0 %v575, 2
    %v582 = vpop.permute.xlu0 %581
    %v584 = vmul.f32 %v572, %v582
    %v585 = vmul.f32 %v580, %v580
    %587 = vrot.lane.b32.xlu0 %v585, 1
    %v588 = vpop.permute.xlu0 %587
    %v590 = vsub.f32 %v584, %v588
    %s591 = sadd.s32 0, 0
    %s592 = smul.u32 %s591, 8
    %v593 = vlaneseq
    %v594 = vshrl.u32 %v593, 7
    %v595 = vstv %s592
    %v596 = vadd.s32 %v595, %v594
    %vm597 = vcmp.lt.s32.totalorder %v596, 8
    %v598 = vsel %vm597, 1, 0
    %v599 = vcvt.s32.f32 %v598
    %601 = vrot.lane.b32.xlu0 %v75, 1
    %v602 = vpop.permute.xlu0 %601
    %v604 = vsub.f32 %v580, %v602
    %s605 = sld [smem:[#allocation2]]
    %v606 = vmul.f32 %v604, %v604
    %v607 = vmul.f32 %v606, %v599
    %609 = vrot.lane.b32.xlu0 %v607, 127
    %v610 = vpop.permute.xlu0 %609
    %vm612 = vcmask 7168
    %v613 = vsel %vm612, %v610, 0.0
    %614 = vadd.xlane.f32.xlu0 %v613
    %v615 = vpop.xlane.xlu0 %614
    %v616 = vrot.slane %v615, 4
    %v617 = vadd.f32 %v615, %v616
    %v618 = vrot.slane %v617, 2
    %v619 = vadd.f32 %v617, %v618
    %v620 = vrot.slane %v619, 1
    %v621 = vadd.f32 %v619, %v620
    %s622 = vtos %v621
    %s623 = sadd.f32 %s605, %s622
    %s624 = scalar_lea.smem [#allocation2], 0
    %625 = sst [smem:[%s624]] %s623
    %s626 = sld [smem:[#allocation2 + $0x1]]
    %v627 = vmul.f32 %v590, %v599
    %629 = vrot.lane.b32.xlu0 %v627, 126
    %v630 = vpop.permute.xlu0 %629
    %v632 = vsel %vm612, %v630, 0.0
    %633 = vadd.xlane.f32.xlu0 %v632
    %v634 = vpop.xlane.xlu0 %633
    %v635 = vrot.slane %v634, 4
    %v636 = vadd.f32 %v634, %v635
    %v637 = vrot.slane %v636, 2
    %v638 = vadd.f32 %v636, %v637
    %v639 = vrot.slane %v638, 1
    %v640 = vadd.f32 %v638, %v639
    %s641 = vtos %v640
    %s642 = sadd.f32 %s626, %s641
    %s643 = scalar_lea.smem [#allocation2], 1
    %644 = sst [smem:[%s643]] %s642
    // Predicated region
    $region22: #{tpu_custom_call.1} parent=1 // pred_check
      %p645 = pneg %p66
    $region23: #{tpu_custom_call.1} parent=1 // pred_check_branch
      %647 = sbr.rel (%p645) target = $region25
    $region24: #{tpu_custom_call.1} parent=1 // pred_region
      %s648 = sld [smem:[#allocation2]]
      %s649 = smul.f32 %s648, 0.1
      %s650 = smul.f32 %s649, 0.125
      %s651 = scalar_lea.smem [#allocation6], 0
      %652 = sst [smem:[%s651]] %s650
      %s653 = sld [smem:[#allocation2 + $0x1]]
      %s654 = smul.f32 %s653, 0.05
      %s655 = smul.f32 %s654, 0.125
      %s656 = scalar_lea.smem [#allocation7], 0
      %657 = sst [smem:[%s656]] %s655
    $region25: #{tpu_custom_call.1} parent=1 // pred_fallthru
      _
    // Predicated region
    $region26: #{tpu_custom_call.1} parent=1 // pred_check
      _
    $region27: #{tpu_custom_call.1} parent=1 // pred_check_branch
      %659 = sbr.rel (0) target = $region29
    $region28: #{tpu_custom_call.1} parent=1 // pred_region
      %s661 = ssub.s32 16, 16
      %662 = vsyncadd [#allocation5], %s661
      %665 = dma.smem_to_hbm [#allocation6], 16, %s3, [#allocation5]
    $region29: #{tpu_custom_call.1} parent=1 // pred_fallthru
      _
    // Predicated region
    $region30: #{tpu_custom_call.1} parent=1 // pred_check
      _
    $region31: #{tpu_custom_call.1} parent=1 // pred_check_branch
      %667 = sbr.rel (0) target = $region33
    $region32: #{tpu_custom_call.1} parent=1 // pred_region
      %s669 = ssub.s32 16, 16
      %670 = vsyncadd [#allocation8], %s669
      %673 = dma.smem_to_hbm [#allocation7], 16, %s4, [#allocation8]
    $region33: #{tpu_custom_call.1} parent=1 // pred_fallthru
      _
    // Predicated region
    $region34: #{tpu_custom_call.1} parent=1 // pred_check
      _
    $region35: #{tpu_custom_call.1} parent=1 // pred_check_branch
      %675 = sbr.rel (0) target = $region37
    $region36: #{tpu_custom_call.1} parent=1 // pred_region
      %676 = dma.done [#allocation5], 16
    $region37: #{tpu_custom_call.1} parent=1 // pred_fallthru
      _
    // Predicated region
    $region38: #{tpu_custom_call.1} parent=1 // pred_check
      _
    $region39: #{tpu_custom_call.1} parent=1 // pred_check_branch
      %678 = sbr.rel (0) target = $region41
    $region40: #{tpu_custom_call.1} parent=1 // pred_region
      %679 = dma.done [#allocation8], 16
    $region41: #{tpu_custom_call.1} parent=1 // pred_fallthru
      _
    %680 = sfence
    %681 = vsyncpa [#allocation4], 1
    %682 = vsyncpa [#allocation5], 1
    %683 = vsyncpa [#allocation8], 1

</llo_original>
